<compile_context>
chip_gen: v6e
topology: v6e:2x2x1
jax: 0.10.0
libtpu: 0.0.40
codegen_flags: <defaults>
</compile_context>

<pallas_src>
import jax
import jax.numpy as jnp
from jax.experimental import pallas as pl
from jax.experimental.pallas import tpu as pltpu

_LANE = 128
_SUBLANE = 8
_VMEM_LIMIT_BYTES = 48 * 1024 * 1024   # < 64 MiB/TC (v7x), > 16/32 MiB defaults (v5e/v6e)
_VMEM_BUDGET_BYTES = 40 * 1024 * 1024  # working-set budget used to size TM
_TM_CAP = 4096


def _round_up(x: int, m: int) -> int:
    return ((x + m - 1) // m) * m


def _matmul_kernel(a_ref, w_ref, o_ref):
    # One M-tile per grid step; the (tiny) weight tile is resident in VMEM
    # (constant index_map).  f32 accumulation on the MXU, cast on store.
    o_ref[...] = jnp.dot(
        a_ref[...], w_ref[...], preferred_element_type=jnp.float32
    ).astype(o_ref.dtype)


def _choose_tm(M, K, N, in_bytes, out_bytes, *,
               vmem_budget=_VMEM_BUDGET_BYTES, tm_cap=_TM_CAP):
    """Largest M-tile whose double-buffered working set fits the VMEM budget.

    Accounting notes:
      * The LHS lane dimension pads to 128 in VMEM, so the per-row LHS cost is
        2 * max(K, 128) * in_bytes (matters for DiT where K = C*p*p is tiny).
      * The resident weight is still double-buffered by the pipeline, so it is
        charged twice.
      * Per output row: double-buffered output + an f32 matmul temp row.
    """
    k_lanes = _round_up(max(K, _LANE), _LANE)
    per_row = 2 * k_lanes * in_bytes + 2 * N * out_bytes + N * 4
    weight_bytes = 2 * K * N * in_bytes
    budget = vmem_budget - weight_bytes
    if budget < per_row * 2 * _SUBLANE:
        # Fail fast instead of silently degrading to a pathological tiny tile
        # or a compile-time VMEM failure; huge K*N would need an N-tiled variant.
        raise ValueError(
            f"PatchEmbedding weight ({weight_bytes} B double-buffered) does not "
            f"leave room for row tiles in the {vmem_budget} B VMEM budget; an "
            f"N-tiled kernel variant is required for K*N this large.")
    tm = min(budget // per_row, tm_cap)

    min_tile = 256
    if M <= 2 * min_tile:
        # Tiny problem: a single full-extent block along M is always legal.
        return int(M)
    # Keep >= 2 (balanced) row tiles so ("parallel",) can split the grid over
    # v7x's two TensorCores; no effect on v5e/v6e (1 TC).
    tm = min(tm, _round_up(pl.cdiv(M, 2), min_tile))
    if tm >= min_tile:
        tm = (tm // min_tile) * min_tile
    else:
        tm = max((tm // _SUBLANE) * _SUBLANE, _SUBLANE)
    return int(tm)


def patch_embed_matmul(a: jax.Array, w: jax.Array, *, out_dtype) -> jax.Array:
    """a: [M, K], w: [K, N] (N a multiple of 128) -> [M, N] in out_dtype."""
    M, K = a.shape
    K2, N = w.shape
    assert K == K2
    assert N % _LANE == 0, "pad N to a multiple of 128 for a lane-dense store path"

    in_bytes = jnp.dtype(a.dtype).itemsize
    out_bytes = jnp.dtype(out_dtype).itemsize
    tm = _choose_tm(M, K, N, in_bytes, out_bytes)
    grid = (pl.cdiv(M, tm),)

    cost = pl.CostEstimate(
        flops=2 * M * K * N,
        transcendentals=0,
        bytes_accessed=M * K * in_bytes + K * N * in_bytes + M * N * out_bytes,
    )
    return pl.pallas_call(
        _matmul_kernel,
        out_shape=jax.ShapeDtypeStruct((M, N), out_dtype),
        grid=grid,
        in_specs=[
            pl.BlockSpec((tm, K), lambda i: (i, 0)),   # A: stream row tiles
            pl.BlockSpec((K, N), lambda i: (0, 0)),    # W: resident in VMEM
        ],
        out_specs=pl.BlockSpec((tm, N), lambda i: (i, 0)),  # lane-dense N
        compiler_params=pltpu.CompilerParams(
            dimension_semantics=("parallel",),          # 2 TCs on v7x; no-op v5e/v6e
            vmem_limit_bytes=_VMEM_LIMIT_BYTES,
        ),
        cost_estimate=cost,
    )(a, w)


def patch_embedding_forward(x: jax.Array, conv_weight: jax.Array, patch_size: int,
                            *, compute_dtype=jnp.bfloat16, out_dtype=None):
    """Forward pass of PatchEmbedding.

    x:           [B, C, H, W]       (NCHW, matching PyTorch)
    conv_weight: [hidden, C, p, p]  (PyTorch Conv2d weight layout; bias=False
                                     exactly as in the reference module)
    returns (tokens [B, h*w, hidden], h, w)

    Precision: inputs are cast to `compute_dtype` (bf16 by default) and the
    matmul accumulates in f32; the OUTPUT also defaults to `compute_dtype`
    because the kernel is bound by the M*N output write.  Pass
    compute_dtype=out_dtype=jnp.float32 for strict f32 Conv2d parity.
    """
    B, C, H, W = x.shape
    hidden = conv_weight.shape[0]
    p = patch_size
    h, w = H // p, W // p
    out_dtype = compute_dtype if out_dtype is None else out_dtype

    xc = x.astype(compute_dtype)
    wc = conv_weight.astype(compute_dtype)

    # Patch extraction (layout glue in XLA).  Inner flatten order (c, ph, pw)
    # matches the OIHW Conv2d weight flattening.
    # [B, C, h, p, w, p] -> [B, h, w, C, p, p] -> [B*h*w, C*p*p]
    # TODO(synk): fuse this extraction into the Pallas kernel so x is read
    # from HBM once (see header note).
    patches = xc.reshape(B, C, h, p, w, p)
    patches = jnp.transpose(patches, (0, 2, 4, 1, 3, 5))
    a = patches.reshape(B * h * w, C * p * p)

    # [hidden, C, p, p] -> [C*p*p, hidden]; zero-pad hidden up to a multiple of
    # 128 so the store path is unmasked/lane-dense (no-op for 768/1152).
    wm = wc.reshape(hidden, C * p * p).T
    n_pad = (-hidden) % _LANE
    if n_pad:
        wm = jnp.pad(wm, ((0, 0), (0, n_pad)))

    out = patch_embed_matmul(a, wm, out_dtype=out_dtype)   # [B*h*w, hidden(+pad)]
    if n_pad:
        out = out[:, :hidden]
    tokens = out.reshape(B, h * w, hidden)                  # 'b (h w) c'
    return tokens, h, w


if __name__ == "__main__":
    # Small, module-consistent shapes.
    B, C, H, W = 2, 4, 16, 16
    patch_size = 4
    hidden = 32

    key = jax.random.PRNGKey(0)
    kx, kw = jax.random.split(key)
    x = jax.random.normal(kx, (B, C, H, W), dtype=jnp.float32)
    # Deterministic synthetic conv weight (Conv2d shape: [hidden, C, p, p]).
    conv_weight = jax.random.normal(
        kw, (hidden, C, patch_size, patch_size), dtype=jnp.float32
    ) * 0.02

    tokens, h, w = patch_embedding_forward(x, conv_weight, patch_size)
    tokens = jax.block_until_ready(tokens)

    # Reference: lax.conv with the same bf16 inputs / f32 accumulation.
    ref = jax.lax.conv_general_dilated(
        x.astype(jnp.bfloat16), conv_weight.astype(jnp.bfloat16),
        window_strides=(patch_size, patch_size),
        padding="VALID",
        dimension_numbers=("NCHW", "OIHW", "NCHW"),
        preferred_element_type=jnp.float32,
    )  # [B, hidden, h, w]
    ref_tokens = jnp.transpose(ref, (0, 2, 3, 1)).reshape(B, h * w, hidden)
    ref_tokens = ref_tokens.astype(tokens.dtype)

    assert tokens.shape == (B, h * w, hidden)
    assert tokens.dtype == jnp.bfloat16          # bf16 output is now the default
    assert (h, w) == (H // patch_size, W // patch_size)
    assert jnp.allclose(tokens.astype(jnp.float32), ref_tokens.astype(jnp.float32),
                        atol=2e-2, rtol=2e-2)
    print("KERNEL_OK")
</pallas_src>

<mosaic_0001>
module attributes {stable_mosaic.version = 11 : i64} {
  func.func @_matmul_kernel(%arg0: i32, %arg1: memref<32x64xbf16, #tpu.memory_space<vmem>>, %arg2: memref<64x128xbf16, #tpu.memory_space<vmem>>, %arg3: memref<32x128xbf16, #tpu.memory_space<vmem>>) attributes {dimension_semantics = [#tpu.dimension_semantics<parallel>], iteration_bounds = array<i64: 1>, scalar_prefetch = 0 : i64, scratch_operands = 0 : i64, tpu.core_type = #tpu.core_type<tc>, window_params = [{transform_indices = @transform_0, window_bounds = array<i64: 32, 64>}, {pipeline_mode = #tpu.pipeline_mode<synchronous>, transform_indices = @transform_1, window_bounds = array<i64: 64, 128>}, {transform_indices = @transform_2, window_bounds = array<i64: 32, 128>}]} {
    %c0 = arith.constant 0 : index
    %c0_0 = arith.constant 0 : index
    %0 = vector.load %arg1[%c0, %c0_0] : memref<32x64xbf16, #tpu.memory_space<vmem>>, vector<32x64xbf16>
    %c0_1 = arith.constant 0 : index
    %c0_2 = arith.constant 0 : index
    %1 = vector.load %arg2[%c0_1, %c0_2] : memref<64x128xbf16, #tpu.memory_space<vmem>>, vector<64x128xbf16>
    %cst = arith.constant dense<0.000000e+00> : vector<32x128xf32>
    %2 = tpu.matmul %0, %1, %cst {dimension_numbers = #tpu.dot_dimension_numbers<[1], [0], [0], [1], [0, 0, 1, 1], [], []>} : vector<32x64xbf16>, vector<64x128xbf16>, vector<32x128xf32> -> vector<32x128xf32>
    %3 = arith.truncf %2 : vector<32x128xf32> to vector<32x128xbf16>
    %c0_3 = arith.constant 0 : index
    %c0_4 = arith.constant 0 : index
    %4 = vector.load %arg3[%c0_3, %c0_4] : memref<32x128xbf16, #tpu.memory_space<vmem>>, vector<32x128xbf16>
    tpu.vector_store %arg3[%c0_3, %c0_4], %3 {strides = array<i32>} : memref<32x128xbf16, #tpu.memory_space<vmem>>, vector<32x128xbf16>,
    return
  }
  func.func @transform_0(%arg0: i32) -> (i32, i32) {
    %c0_i32 = arith.constant 0 : i32
    %c0_i32_0 = arith.constant 0 : i32
    return %arg0, %c0_i32 : i32, i32
  }
  func.func @transform_1(%arg0: i32) -> (i32, i32) {
    %c0_i32 = arith.constant 0 : i32
    %c0_i32_0 = arith.constant 0 : i32
    %c0_i32_1 = arith.constant 0 : i32
    return %c0_i32, %c0_i32_0 : i32, i32
  }
  func.func @transform_2(%arg0: i32) -> (i32, i32) {
    %c0_i32 = arith.constant 0 : i32
    %c0_i32_0 = arith.constant 0 : i32
    return %arg0, %c0_i32 : i32, i32
  }
}

</mosaic_0001>

<llo_original>
// kernel: tpu_custom_call.1
$region0: #{tpu_custom_call.1}
  #allocation0 [shape = 'u32[]', space=smem, size = 0x4, offset = 0x4, fixed_abs, tag = 'smem constant byte address 0x4 - core index']
  #allocation1 [shape = 'u32[144,128]{1,0:T(1,128)}', space=vmem, size = 0x12000, scoped, tag = 'internal scratch']
  %s0 = inlined_call_operand.hbm [shape: bf16[32,64], index: 0, kind: input, shape index: {}]
  %s1 = inlined_call_operand.hbm [shape: bf16[64,128], index: 1, kind: input, shape index: {}]
  %s2 = inlined_call_operand.hbm [shape: bf16[32,128], index: 2, kind: output, shape index: {}]
  %s3 = sld [smem:[#allocation0]]
  $region26: #{tpu_custom_call.1} parent=0
    _
  %s5 = ssub.s32 1, %s3
  %s6 = scalar_select 0, %s5, %s3
  $region1: #{tpu_custom_call.1} parent=0
    #allocation2 [shape = 'u8[8192]{0}', space=vmem, size = 0x2000, scoped, tag = 'input window, operand 0, single buffered']
    #allocation3 [shape = 's32[1]{0}', space=sflag, size = 0x4, scoped, tag = 'scoped memory for tpu_custom_call.1']
    #allocation4 [shape = 's32[1]{0}', space=sflag, size = 0x4, scoped, tag = 'scoped memory for tpu_custom_call.1']
    #allocation5 [shape = 'u8[16384]{0}', space=vmem, size = 0x4000, scoped, tag = 'input window, operand 1, single buffered']
    #allocation6 [shape = 's32[1]{0}', space=sflag, size = 0x4, scoped, tag = 'scoped memory for tpu_custom_call.1']
    #allocation7 [shape = 'u8[8192]{0}', space=vmem, size = 0x2000, scoped, tag = 'output window, operand 0, single buffered']
    %7 = vsyncpa [#allocation3], 0
    %8 = vsyncpa [#allocation6], 0
    %9 = vsyncpa [#allocation4], 0
    // Predicated region
    $region2: #{tpu_custom_call.1} parent=1 // pred_check
      _
    $region3: #{tpu_custom_call.1} parent=1 // pred_check_branch
      %11 = sbr.rel (0) target = $region5
    $region4: #{tpu_custom_call.1} parent=1 // pred_region
      %s13 = ssub.s32 256, 256
      %14 = vsyncadd [#allocation3], %s13
      %s15 = sshll.u32 [#allocation2], 4
      %s16 = int_to_ptr.vmem [resolvable:$true] %s15
      %21 = dma.hbm_to_vmem [thread:$0]  %s0, 256, %s16, [#allocation3], 64, 64, 4
    $region5: #{tpu_custom_call.1} parent=1 // pred_fallthru
      _
    // Predicated region
    $region6: #{tpu_custom_call.1} parent=1 // pred_check
      _
    $region7: #{tpu_custom_call.1} parent=1 // pred_check_branch
      %23 = sbr.rel (0) target = $region9
    $region8: #{tpu_custom_call.1} parent=1 // pred_region
      %s25 = ssub.s32 512, 512
      %26 = vsyncadd [#allocation6], %s25
      %s27 = sshll.u32 [#allocation5], 4
      %s28 = int_to_ptr.vmem [resolvable:$true] %s27
      %33 = dma.hbm_to_vmem [thread:$0]  %s1, 512, %s28, [#allocation6], 64, 64, 4
    $region9: #{tpu_custom_call.1} parent=1 // pred_fallthru
      _
    // Predicated region
    $region10: #{tpu_custom_call.1} parent=1 // pred_check
      _
    $region11: #{tpu_custom_call.1} parent=1 // pred_check_branch
      %35 = sbr.rel (0) target = $region13
    $region12: #{tpu_custom_call.1} parent=1 // pred_region
      %36 = dma.done [#allocation3], 256
    $region13: #{tpu_custom_call.1} parent=1 // pred_fallthru
      _
    // Predicated region
    $region14: #{tpu_custom_call.1} parent=1 // pred_check
      _
    $region15: #{tpu_custom_call.1} parent=1 // pred_check_branch
      %38 = sbr.rel (0) target = $region17
    $region16: #{tpu_custom_call.1} parent=1 // pred_region
      %39 = dma.done [#allocation6], 512
    $region17: #{tpu_custom_call.1} parent=1 // pred_fallthru
      _
    %v41 = vld [vmem:[#allocation2] sm:$0xf]
    %v42 = vld [vmem:[#allocation2 + $0x4] sm:$0xf]
    %v43 = vld [vmem:[#allocation2 + $0x8] sm:$0xf]
    %v44 = vld [vmem:[#allocation2 + $0xc] sm:$0xf]
    %v45 = vld [vmem:[#allocation5] sm:$0xf]
    %v46 = vld [vmem:[#allocation5 + $0x4] sm:$0xf]
    %v47 = vld [vmem:[#allocation5 + $0x8] sm:$0xf]
    %v48 = vld [vmem:[#allocation5 + $0xc] sm:$0xf]
    %v49 = vld [vmem:[#allocation5 + $0x10] sm:$0xf]
    %v50 = vld [vmem:[#allocation5 + $0x14] sm:$0xf]
    %v51 = vld [vmem:[#allocation5 + $0x18] sm:$0xf]
    %v52 = vld [vmem:[#allocation5 + $0x1c] sm:$0xf]
    %v57 = vunpack.c.l.b16 %v41
    %v58 = vunpack.c.l.b16 %v42
    %v59 = vunpack.c.l.b16 %v43
    %v60 = vunpack.c.l.b16 %v44
    %v61 = vpack.c.b16 %v58, %v57
    %v62 = vpack.c.b16 %v60, %v59
    %v71 = vunpack.c.l.b16 %v45
    %v72 = vunpack.c.l.b16 %v46
    %v73 = vunpack.c.l.b16 %v47
    %v74 = vunpack.c.l.b16 %v48
    %v75 = vunpack.c.l.b16 %v49
    %v76 = vunpack.c.l.b16 %v50
    %v77 = vunpack.c.l.b16 %v51
    %v78 = vunpack.c.l.b16 %v52
    %v79 = vpack.c.b16 %v72, %v71
    %v80 = vpack.c.b16 %v74, %v73
    %v81 = vpack.c.b16 %v76, %v75
    %v82 = vpack.c.b16 %v78, %v77
    %vm87 = vcmask 523264
    %v89 = vsel %vm87, %v61, 0
    %v92 = vsel %vm87, %v62, 0
    %94 = vmatprep.subr.bf16.mxu0 0
    %95 = vmatpush1.bf16.msra.mxu0 0
    %96 = vmatprep.subr.bf16.mxu0 0
    %97 = vmatpush1.bf16.msra.mxu0 0
    %98 = vmatprep.subr.bf16.mxu0 0
    %99 = vmatpush1.bf16.msra.mxu0 0
    %100 = vmatprep.subr.bf16.mxu0 0
    %101 = vmatpush1.bf16.msra.mxu0 0
    %102 = vmatprep.subr.bf16.mxu0 0
    %103 = vmatpush1.bf16.msra.mxu0 %v82
    %104 = vmatprep.subr.bf16.mxu0 0
    %105 = vmatpush1.bf16.msra.mxu0 %v81
    %106 = vmatprep.subr.bf16.mxu0 0
    %107 = vmatpush1.bf16.msra.mxu0 %v80
    %108 = vmatprep.subr.bf16.mxu0 0
    %109 = vmatpush1.bf16.msra.mxu0 %v79
    %110 = vmatprep.subr.bf16.mxu0 0
    %111 = vmatpush2.bf16.msra.mxu0 0
    %112 = vmatprep.subr.bf16.mxu0 0
    %113 = vmatpush2.bf16.msra.mxu0 0
    %114 = vmatprep.subr.bf16.mxu0 0
    %115 = vmatpush2.bf16.msra.mxu0 0
    %116 = vmatprep.subr.bf16.mxu0 0
    %117 = vmatpush2.bf16.msra.mxu0 0
    %118 = vmatprep.subr.bf16.mxu0 0
    %119 = vmatpush2.bf16.msra.mxu0 0
    %120 = vmatprep.subr.bf16.mxu0 0
    %121 = vmatpush2.bf16.msra.mxu0 0
    %122 = vmatprep.subr.bf16.mxu0 0
    %123 = vmatpush2.bf16.msra.mxu0 0
    %124 = vmatprep.subr.bf16.mxu0 0
    %125 = vmatpush2.bf16.msra.mxu0 0
    %126 = vmatprep.mubr.bf16.mxu0 0
    %127 = vmatmul.mubr.bf16.gmra.mxu0 %v89
    %v128 = vpop.f32.mrf.mxu0
    %v129 = vadd.f32 0.0, %v128
    %v130 = vpop.f32.mrf.mxu0
    %v131 = vpop.f32.mrf.mxu0
    %v132 = vadd.f32 0.0, %v131
    %v133 = vpop.f32.mrf.mxu0
    %134 = vmatprep.mubr.bf16.mxu0 0
    %135 = vmatmul.mubr.bf16.gmra.mxu0 %v92
    %v136 = vpop.f32.mrf.mxu0
    %v137 = vadd.f32 0.0, %v136
    %v138 = vpop.f32.mrf.mxu0
    %v139 = vpop.f32.mrf.mxu0
    %v140 = vadd.f32 0.0, %v139
    %v141 = vpop.f32.mrf.mxu0
    %142 = vdwg.mxu0
    %v143 = vpack.c.bf16 %v132, %v129
    %v144 = vpack.c.bf16 %v140, %v137
    %v147 = vunpack.c.l.b16 %v143
    %v148 = vunpack.c.h.b16 %v143
    %v149 = vunpack.c.l.b16 %v144
    %v150 = vunpack.c.h.b16 %v144
    %v151 = vpack.c.b16 %v147, %v147
    %v152 = vpack.c.b16 %v148, %v148
    %v153 = vpack.c.b16 %v149, %v149
    %v154 = vpack.c.b16 %v150, %v150
    %159 = vst [vmem:[#allocation7] sm:$0xf] %v151
    %160 = vst [vmem:[#allocation7 + $0x4] sm:$0xf] %v152
    %161 = vst [vmem:[#allocation7 + $0x8] sm:$0xf] %v153
    %162 = vst [vmem:[#allocation7 + $0xc] sm:$0xf] %v154
    // Predicated region
    $region18: #{tpu_custom_call.1} parent=1 // pred_check
      _
    $region19: #{tpu_custom_call.1} parent=1 // pred_check_branch
      %164 = sbr.rel (0) target = $region21
    $region20: #{tpu_custom_call.1} parent=1 // pred_region
      %s166 = ssub.s32 256, 256
      %167 = vsyncadd [#allocation4], %s166
      %s168 = sshll.u32 [#allocation7], 4
      %s169 = int_to_ptr.vmem [resolvable:$true] %s168
      %174 = dma.vmem_to_hbm [thread:$0]  %s169, 256, %s2, [#allocation4], 64, 64, 4
    $region21: #{tpu_custom_call.1} parent=1 // pred_fallthru
      _
    // Predicated region
    $region22: #{tpu_custom_call.1} parent=1 // pred_check
      _
    $region23: #{tpu_custom_call.1} parent=1 // pred_check_branch
      %176 = sbr.rel (0) target = $region25
    $region24: #{tpu_custom_call.1} parent=1 // pred_region
      %177 = dma.done [#allocation4], 256
    $region25: #{tpu_custom_call.1} parent=1 // pred_fallthru
      _
    %178 = vsyncpa [#allocation3], 1
    %179 = vsyncpa [#allocation6], 1
    %180 = vsyncpa [#allocation4], 1

</llo_original>
